<compile_context>
chip_gen: v5e
topology: v5e:2x2
jax: 0.10.0
libtpu: 0.0.40
codegen_flags: <defaults>
</compile_context>

<pallas_src>
import jax
import jax.numpy as jnp
from jax.experimental import pallas as pl
from jax.experimental.pallas import tpu as pltpu


def _round_up(v, m):
    return ((v + m - 1) // m) * m


def meshconv_kernel(x_ref, f_ref, ws_ref, wn_ref, wa_ref, b_ref, o_ref, a_ref):
    """One MeshConv tile (edges on lanes).

    x_ref : (Cp_in, TN)       bf16  self-tap features f0 (straight from the table)
    f_ref : (4*Cp_in, TN)     bf16  gathered neighbor taps [f1; f2; f3; f4]
    ws_ref: (Cp_out, Cp_in)   bf16  w0                (self tap)
    wn_ref: (Cp_out, 4*Cp_in) bf16  [w1, w2, w1, w2]  (linear part of f1..f4)
    wa_ref: (Cp_out, 2*Cp_in) bf16  [w3, w4]          (abs part)
    b_ref : (Cp_out, 1)       f32   bias column
    o_ref : (Cp_out, TN)      f32   lane-dense output tile
    a_ref : (2*Cp_in, TN)     bf16  VMEM scratch for [|f1-f3|; |f2-f4|]
    """
    cp = x_ref.shape[0]
    f1 = f_ref[0 * cp:1 * cp, :]
    f2 = f_ref[1 * cp:2 * cp, :]
    f3 = f_ref[2 * cp:3 * cp, :]
    f4 = f_ref[3 * cp:4 * cp, :]
    # only the non-linear part of the symmetric functions needs assembling
    a_ref[0 * cp:1 * cp, :] = jnp.abs(f1 - f3)
    a_ref[1 * cp:2 * cp, :] = jnp.abs(f2 - f4)
    # (1,5) conv == three fused MXU matmuls, f32 accumulation
    acc = jnp.dot(ws_ref[...], x_ref[...], preferred_element_type=jnp.float32)
    acc += jnp.dot(wn_ref[...], f_ref[...], preferred_element_type=jnp.float32)
    acc += jnp.dot(wa_ref[...], a_ref[...], preferred_element_type=jnp.float32)
    o_ref[...] = acc + b_ref[...]


def _mesh_conv_layer(xt, nbr_idx, w, b, tn, Np):
    """One MeshConv layer in edges-on-lanes layout.

    xt:      (Cp_in, B, E) features, channels zero-padded to a multiple of 16
    nbr_idx: (4, Np) int32 indices into the flattened (B*(E+1),) padded edge axis
             (each batch's index 0 is a zero row; padded columns also use 0)
    w:       (C_out, C_in, 1, 5) conv weight, b: (C_out,)
    Returns: (Cp_out, B, E) f32 (next layer's table layout).
    """
    Cp_in, B, E = xt.shape
    C_out, C_in = w.shape[0], w.shape[1]
    Cp_out = _round_up(C_out, 16)
    N = B * E

    xt = xt.astype(jnp.bfloat16)                 # bf16 streaming of the feature table
    # self tap: the table itself, edges flattened onto lanes (no gather needed)
    x_flat = jnp.pad(xt.reshape(Cp_in, N), ((0, 0), (0, Np - N)))
    # neighbor taps: gather from the table with a per-batch zero column at index 0
    table = jnp.pad(xt, ((0, 0), (0, 0), (1, 0))).reshape(Cp_in, B * (E + 1))
    f = jax.vmap(lambda idx: table[:, idx])(nbr_idx)           # (4, Cp_in, Np)
    f = f.reshape(4 * Cp_in, Np)

    # weights: taps of the (1,5) conv reorganized for the 3 fused matmuls
    wt = w[:, :, 0, :].astype(jnp.float32)                      # (C_out, C_in, 5)
    wt = jnp.pad(wt, ((0, Cp_out - C_out), (0, Cp_in - C_in), (0, 0)))
    w0, w1, w2, w3, w4 = (wt[:, :, t] for t in range(5))
    ws = w0.astype(jnp.bfloat16)                                          # (Cp_out, Cp_in)
    wn = jnp.concatenate([w1, w2, w1, w2], axis=1).astype(jnp.bfloat16)   # (Cp_out, 4*Cp_in)
    wa = jnp.concatenate([w3, w4], axis=1).astype(jnp.bfloat16)           # (Cp_out, 2*Cp_in)
    bt = jnp.pad(b.astype(jnp.float32), (0, Cp_out - C_out)).reshape(Cp_out, 1)

    grid = Np // tn
    # VMEM estimate: double-buffered x/f/out tiles + single abs scratch + weights
    vmem_est = (tn * (24 * Cp_in + 8 * Cp_out)
                + 28 * Cp_out * Cp_in + 8 * Cp_out)
    vmem_limit = min(64 << 20, max(32 << 20, vmem_est + (4 << 20)))

    out = pl.pallas_call(
        meshconv_kernel,
        out_shape=jax.ShapeDtypeStruct((Cp_out, Np), jnp.float32),
        grid_spec=pltpu.PrefetchScalarGridSpec(
            num_scalar_prefetch=0,
            grid=(grid,),
            in_specs=[
                pl.BlockSpec((Cp_in, tn), lambda i: (0, i)),
                pl.BlockSpec((4 * Cp_in, tn), lambda i: (0, i)),
                pl.BlockSpec((Cp_out, Cp_in), lambda i: (0, 0)),
                pl.BlockSpec((Cp_out, 4 * Cp_in), lambda i: (0, 0)),
                pl.BlockSpec((Cp_out, 2 * Cp_in), lambda i: (0, 0)),
                pl.BlockSpec((Cp_out, 1), lambda i: (0, 0)),
            ],
            out_specs=pl.BlockSpec((Cp_out, tn), lambda i: (0, i)),
            scratch_shapes=[pltpu.VMEM((2 * Cp_in, tn), jnp.bfloat16)],
        ),
        compiler_params=pltpu.CompilerParams(
            dimension_semantics=("parallel",),
            vmem_limit_bytes=vmem_limit),
    )(x_flat, f, ws, wn, wa, bt)

    return out[:, :N].reshape(Cp_out, B, E)


def _pick_tn(N, cp_in_max, cp_out_max):
    """Largest lane-tile that fits a conservative VMEM budget (v7x-safe)."""
    n_pad = _round_up(N, 128)
    per_lane = 24 * cp_in_max + 8 * cp_out_max     # bytes/lane over all tile buffers
    budget = 20 << 20                              # headroom inside v7x's 64 MiB VMEM
    tn = (budget // per_lane) // 128 * 128
    tn = max(256, min(tn, 4096))
    if n_pad >= 4 * 512:
        # keep the grid >= ~4 steps so both v7x TensorCores get work
        tn = min(tn, max(512, _round_up(-(-N // 4), 128)))
    return min(tn, n_pad)


def conv_block_forward(x, gemm_edges, params):
    """ConvBlock.forward: apply k MeshConv layers sequentially.
    x: (B, in_feat, E) or (B, in_feat, E, 1); gemm_edges: (B, E, 4) int32 (-1 missing).
    Returns (B, out_feat, E, 1)."""
    if x.ndim == 4:
        x = x[..., 0]            # MeshConv does x.squeeze(-1)
    B, C_in, E = x.shape
    N = B * E

    cps = [_round_up(C_in, 16)] + [_round_up(w.shape[0], 16) for (w, _) in params]
    tn = _pick_tn(N, max(cps[:-1]), max(cps[1:]))
    Np = pl.cdiv(N, tn) * tn

    # shared flattened neighbor-gather indices (self tap is NOT gathered)
    Gi = gemm_edges.astype(jnp.int32) + 1                        # 0 == zero row
    Gi = jnp.transpose(Gi, (2, 0, 1)).reshape(4, N)              # (4, N)
    boff = jnp.repeat(jnp.arange(B, dtype=jnp.int32) * (E + 1), E)[None]
    nbr_idx = jnp.pad(Gi + boff, ((0, 0), (0, Np - N)))          # (4, Np)

    Cp_in = cps[0]
    xt = jnp.transpose(x, (1, 0, 2)).astype(jnp.float32)         # (C_in, B, E)
    xt = jnp.pad(xt, ((0, Cp_in - C_in), (0, 0), (0, 0)))
    for (w, b) in params:
        xt = _mesh_conv_layer(xt, nbr_idx, w, b, tn, Np)
    C_out = params[-1][0].shape[0]
    return jnp.transpose(xt[:C_out], (1, 0, 2))[..., None]       # (B, C_out, E, 1)


# ------------------------- pure-JAX reference --------------------------------

def _gather_neighbors_ref(x, gemm_edges):
    B, C_in, E = x.shape
    xp = jnp.concatenate([jnp.zeros((B, C_in, 1), x.dtype), x], axis=2)
    xp_t = jnp.transpose(xp, (0, 2, 1))                                   # (B,E+1,C)
    self_idx = jnp.broadcast_to(
        jnp.arange(E, dtype=jnp.int32)[None, :, None], (B, E, 1))
    Gi = jnp.concatenate([self_idx, gemm_edges.astype(jnp.int32)], axis=2) + 1
    return jax.vmap(lambda xb, gb: xb[gb])(xp_t, Gi)                      # (B,E,5,C)


def mesh_conv_ref(x, gemm_edges, w, b):
    f = _gather_neighbors_ref(x, gemm_edges)            # (B, E, 5, C_in)
    f = jnp.transpose(f, (0, 3, 1, 2))                  # (B, C_in, E, 5)
    x1 = f[..., 1] + f[..., 3]
    x2 = f[..., 2] + f[..., 4]
    x3 = jnp.abs(f[..., 1] - f[..., 3])
    x4 = jnp.abs(f[..., 2] - f[..., 4])
    G = jnp.stack([f[..., 0], x1, x2, x3, x4], axis=3)  # (B, C_in, E, 5)
    out = jnp.einsum('bces,ocs->boe', G, w[:, :, 0, :]) + b[None, :, None]
    return out[..., None]


def conv_block_ref(x, gemm_edges, params):
    for (w, b) in params:
        if x.ndim == 4:
            x = x[..., 0]
        x = mesh_conv_ref(x, gemm_edges, w, b)
    return x


def init_conv_block(key, in_feat, out_feat, k):
    """Deterministic synthetic params for ConvBlock(in_feat, out_feat, k)."""
    params = []
    feats = [in_feat] + [out_feat] * k
    for i in range(k):
        key, kw, kb = jax.random.split(key, 3)
        w = 0.1 * jax.random.normal(kw, (feats[i + 1], feats[i], 1, 5), jnp.float32)
        b = 0.1 * jax.random.normal(kb, (feats[i + 1],), jnp.float32)
        params.append((w, b))
    return params


if __name__ == "__main__":
    key = jax.random.PRNGKey(0)
    B, in_feat, out_feat, k, E = 2, 4, 8, 2, 100

    k_x, k_g, k_p = jax.random.split(key, 3)
    x = jax.random.normal(k_x, (B, in_feat, E), jnp.float32)
    # one-ring neighbor indices per edge; -1 means "no neighbor" (zero-padded row)
    gemm_edges = jax.random.randint(k_g, (B, E, 4), -1, E, dtype=jnp.int32)
    params = init_conv_block(k_p, in_feat, out_feat, k)

    out = conv_block_forward(x, gemm_edges, params)
    out = jax.block_until_ready(out)
    assert out.shape == (B, out_feat, E, 1), out.shape

    ref = jax.block_until_ready(conv_block_ref(x, gemm_edges, params))
    # bf16 streaming path vs f32 reference -> loosened tolerance (f32 accumulation kept)
    assert jnp.allclose(out, ref, atol=5e-2, rtol=5e-2), \
        float(jnp.max(jnp.abs(out - ref)))

    print("KERNEL_OK")
</pallas_src>

<mosaic_0001>
module attributes {stable_mosaic.version = 11 : i64} {
  func.func @meshconv_kernel(%arg0: i32, %arg1: memref<16x256xbf16, #tpu.memory_space<vmem>>, %arg2: memref<64x256xbf16, #tpu.memory_space<vmem>>, %arg3: memref<16x16xbf16, #tpu.memory_space<vmem>>, %arg4: memref<16x64xbf16, #tpu.memory_space<vmem>>, %arg5: memref<16x32xbf16, #tpu.memory_space<vmem>>, %arg6: memref<16x1xf32, #tpu.memory_space<vmem>>, %arg7: memref<16x256xf32, #tpu.memory_space<vmem>>, %arg8: memref<32x256xbf16, #tpu.memory_space<vmem>>) attributes {dimension_semantics = [#tpu.dimension_semantics<parallel>], iteration_bounds = array<i64: 1>, scalar_prefetch = 0 : i64, scratch_operands = 1 : i64, tpu.core_type = #tpu.core_type<tc>, window_params = [{transform_indices = @transform_0, window_bounds = array<i64: 16, 256>}, {transform_indices = @transform_1, window_bounds = array<i64: 64, 256>}, {pipeline_mode = #tpu.pipeline_mode<synchronous>, transform_indices = @transform_2, window_bounds = array<i64: 16, 16>}, {pipeline_mode = #tpu.pipeline_mode<synchronous>, transform_indices = @transform_3, window_bounds = array<i64: 16, 64>}, {pipeline_mode = #tpu.pipeline_mode<synchronous>, transform_indices = @transform_4, window_bounds = array<i64: 16, 32>}, {pipeline_mode = #tpu.pipeline_mode<synchronous>, transform_indices = @transform_5, window_bounds = array<i64: 16, 1>}, {transform_indices = @transform_6, window_bounds = array<i64: 16, 256>}]} {
    %c0 = arith.constant 0 : index
    %c0_0 = arith.constant 0 : index
    %0 = vector.load %arg2[%c0, %c0_0] : memref<64x256xbf16, #tpu.memory_space<vmem>>, vector<16x256xbf16>
    %c16 = arith.constant 16 : index
    %c0_1 = arith.constant 0 : index
    %1 = vector.load %arg2[%c16, %c0_1] : memref<64x256xbf16, #tpu.memory_space<vmem>>, vector<16x256xbf16>
    %c32 = arith.constant 32 : index
    %c0_2 = arith.constant 0 : index
    %2 = vector.load %arg2[%c32, %c0_2] : memref<64x256xbf16, #tpu.memory_space<vmem>>, vector<16x256xbf16>
    %c48 = arith.constant 48 : index
    %c0_3 = arith.constant 0 : index
    %3 = vector.load %arg2[%c48, %c0_3] : memref<64x256xbf16, #tpu.memory_space<vmem>>, vector<16x256xbf16>
    %4 = arith.subf %0, %2 : vector<16x256xbf16>
    %5 = math.absf %4 : vector<16x256xbf16>
    %c0_4 = arith.constant 0 : index
    %c0_5 = arith.constant 0 : index
    %6 = vector.load %arg8[%c0_4, %c0_5] : memref<32x256xbf16, #tpu.memory_space<vmem>>, vector<16x256xbf16>
    tpu.vector_store %arg8[%c0_4, %c0_5], %5 {strides = array<i32>} : memref<32x256xbf16, #tpu.memory_space<vmem>>, vector<16x256xbf16>,
    %7 = arith.subf %1, %3 : vector<16x256xbf16>
    %8 = math.absf %7 : vector<16x256xbf16>
    %c16_6 = arith.constant 16 : index
    %c0_7 = arith.constant 0 : index
    %9 = vector.load %arg8[%c16_6, %c0_7] : memref<32x256xbf16, #tpu.memory_space<vmem>>, vector<16x256xbf16>
    tpu.vector_store %arg8[%c16_6, %c0_7], %8 {strides = array<i32>} : memref<32x256xbf16, #tpu.memory_space<vmem>>, vector<16x256xbf16>,
    %c0_8 = arith.constant 0 : index
    %c0_9 = arith.constant 0 : index
    %10 = vector.load %arg3[%c0_8, %c0_9] : memref<16x16xbf16, #tpu.memory_space<vmem>>, vector<16x16xbf16>
    %c0_10 = arith.constant 0 : index
    %c0_11 = arith.constant 0 : index
    %11 = vector.load %arg1[%c0_10, %c0_11] : memref<16x256xbf16, #tpu.memory_space<vmem>>, vector<16x256xbf16>
    %cst = arith.constant dense<0.000000e+00> : vector<16x256xf32>
    %12 = tpu.matmul %10, %11, %cst {dimension_numbers = #tpu.dot_dimension_numbers<[1], [0], [0], [1], [0, 0, 1, 1], [], []>} : vector<16x16xbf16>, vector<16x256xbf16>, vector<16x256xf32> -> vector<16x256xf32>
    %c0_12 = arith.constant 0 : index
    %c0_13 = arith.constant 0 : index
    %13 = vector.load %arg4[%c0_12, %c0_13] : memref<16x64xbf16, #tpu.memory_space<vmem>>, vector<16x64xbf16>
    %c0_14 = arith.constant 0 : index
    %c0_15 = arith.constant 0 : index
    %14 = vector.load %arg2[%c0_14, %c0_15] : memref<64x256xbf16, #tpu.memory_space<vmem>>, vector<64x256xbf16>
    %cst_16 = arith.constant dense<0.000000e+00> : vector<16x256xf32>
    %15 = tpu.matmul %13, %14, %cst_16 {dimension_numbers = #tpu.dot_dimension_numbers<[1], [0], [0], [1], [0, 0, 1, 1], [], []>} : vector<16x64xbf16>, vector<64x256xbf16>, vector<16x256xf32> -> vector<16x256xf32>
    %16 = arith.addf %12, %15 : vector<16x256xf32>
    %c0_17 = arith.constant 0 : index
    %c0_18 = arith.constant 0 : index
    %17 = vector.load %arg5[%c0_17, %c0_18] : memref<16x32xbf16, #tpu.memory_space<vmem>>, vector<16x32xbf16>
    %c0_19 = arith.constant 0 : index
    %c0_20 = arith.constant 0 : index
    %18 = vector.load %arg8[%c0_19, %c0_20] : memref<32x256xbf16, #tpu.memory_space<vmem>>, vector<32x256xbf16>
    %cst_21 = arith.constant dense<0.000000e+00> : vector<16x256xf32>
    %19 = tpu.matmul %17, %18, %cst_21 {dimension_numbers = #tpu.dot_dimension_numbers<[1], [0], [0], [1], [0, 0, 1, 1], [], []>} : vector<16x32xbf16>, vector<32x256xbf16>, vector<16x256xf32> -> vector<16x256xf32>
    %20 = arith.addf %16, %19 : vector<16x256xf32>
    %c0_22 = arith.constant 0 : index
    %c0_23 = arith.constant 0 : index
    %21 = vector.load %arg6[%c0_22, %c0_23] : memref<16x1xf32, #tpu.memory_space<vmem>>, vector<16x1xf32>
    %22 = vector.broadcast %21 : vector<16x1xf32> to vector<16x256xf32>
    %23 = arith.addf %20, %22 : vector<16x256xf32>
    %c0_24 = arith.constant 0 : index
    %c0_25 = arith.constant 0 : index
    %24 = vector.load %arg7[%c0_24, %c0_25] : memref<16x256xf32, #tpu.memory_space<vmem>>, vector<16x256xf32>
    tpu.vector_store %arg7[%c0_24, %c0_25], %23 {strides = array<i32>} : memref<16x256xf32, #tpu.memory_space<vmem>>, vector<16x256xf32>,
    return
  }
  func.func @transform_0(%arg0: i32) -> (i32, i32) {
    %c0_i32 = arith.constant 0 : i32
    %c0_i32_0 = arith.constant 0 : i32
    return %c0_i32, %arg0 : i32, i32
  }
  func.func @transform_1(%arg0: i32) -> (i32, i32) {
    %c0_i32 = arith.constant 0 : i32
    %c0_i32_0 = arith.constant 0 : i32
    return %c0_i32, %arg0 : i32, i32
  }
  func.func @transform_2(%arg0: i32) -> (i32, i32) {
    %c0_i32 = arith.constant 0 : i32
    %c0_i32_0 = arith.constant 0 : i32
    %c0_i32_1 = arith.constant 0 : i32
    return %c0_i32, %c0_i32_0 : i32, i32
  }
  func.func @transform_3(%arg0: i32) -> (i32, i32) {
    %c0_i32 = arith.constant 0 : i32
    %c0_i32_0 = arith.constant 0 : i32
    %c0_i32_1 = arith.constant 0 : i32
    return %c0_i32, %c0_i32_0 : i32, i32
  }
  func.func @transform_4(%arg0: i32) -> (i32, i32) {
    %c0_i32 = arith.constant 0 : i32
    %c0_i32_0 = arith.constant 0 : i32
    %c0_i32_1 = arith.constant 0 : i32
    return %c0_i32, %c0_i32_0 : i32, i32
  }
  func.func @transform_5(%arg0: i32) -> (i32, i32) {
    %c0_i32 = arith.constant 0 : i32
    %c0_i32_0 = arith.constant 0 : i32
    %c0_i32_1 = arith.constant 0 : i32
    return %c0_i32, %c0_i32_0 : i32, i32
  }
  func.func @transform_6(%arg0: i32) -> (i32, i32) {
    %c0_i32 = arith.constant 0 : i32
    %c0_i32_0 = arith.constant 0 : i32
    return %c0_i32, %arg0 : i32, i32
  }
}

</mosaic_0001>

<llo_original>
// kernel: tpu_custom_call.1
$region0: #{tpu_custom_call.1}
  #allocation0 [shape = 'u32[]', space=smem, size = 0x4, offset = 0x4, fixed_abs, tag = 'smem constant byte address 0x4 - core index']
  #allocation1 [shape = 'u32[72,128]{1,0:T(1,128)}', space=vmem, size = 0x9000, scoped, tag = 'internal scratch']
  #allocation2 [shape = 'bf16[32,256]{1,0:T(8,128)(2,1)}', space=vmem, size = 0x4000, scoped, tag = 'scratch operand']
  %s0 = inlined_call_operand.vmem [shape: bf16[16,256], index: 0, kind: input, shape index: {}]
  %s1 = inlined_call_operand.hbm [shape: bf16[64,256], index: 1, kind: input, shape index: {}]
  %s2 = inlined_call_operand.hbm [shape: bf16[16,16], index: 2, kind: input, shape index: {}]
  %s3 = inlined_call_operand.hbm [shape: bf16[16,64], index: 3, kind: input, shape index: {}]
  %s4 = inlined_call_operand.hbm [shape: bf16[16,32], index: 4, kind: input, shape index: {}]
  %s5 = inlined_call_operand.vmem [shape: f32[16,1], index: 5, kind: input, shape index: {}]
  %s6 = inlined_call_operand.hbm [shape: f32[16,256], index: 6, kind: output, shape index: {}]
  %s7 = sld [smem:[#allocation0]]
  $region50: #{tpu_custom_call.1} parent=0
    _
  %s9 = ssub.s32 1, %s7
  %s10 = scalar_select 0, %s9, %s7
  $region1: #{tpu_custom_call.1} parent=0
    #allocation3 [shape = 'u8[32768]{0}', space=vmem, size = 0x8000, scoped, tag = 'input window, operand 1, single buffered']
    #allocation4 [shape = 's32[1]{0}', space=sflag, size = 0x4, scoped, tag = 'scoped memory for tpu_custom_call.1']
    #allocation5 [shape = 's32[1]{0}', space=sflag, size = 0x4, scoped, tag = 'scoped memory for tpu_custom_call.1']
    #allocation6 [shape = 'u8[4096]{0}', space=vmem, size = 0x1000, scoped, tag = 'input window, operand 2, single buffered']
    #allocation7 [shape = 's32[1]{0}', space=sflag, size = 0x4, scoped, tag = 'scoped memory for tpu_custom_call.1']
    #allocation8 [shape = 'u8[4096]{0}', space=vmem, size = 0x1000, scoped, tag = 'input window, operand 3, single buffered']
    #allocation9 [shape = 'u8[4096]{0}', space=vmem, size = 0x1000, scoped, tag = 'input window, operand 4, single buffered']
    #allocation10 [shape = 's32[1]{0}', space=sflag, size = 0x4, scoped, tag = 'scoped memory for tpu_custom_call.1']
    #allocation11 [shape = 'u8[16384]{0}', space=vmem, size = 0x4000, scoped, tag = 'output window, operand 0, single buffered']
    %11 = vsyncpa [#allocation4], 0
    %12 = vsyncpa [#allocation7], 0
    %13 = vsyncpa [#allocation10], 0
    %14 = vsyncpa [#allocation5], 0
    // Predicated region
    $region2: #{tpu_custom_call.1} parent=1 // pred_check
      _
    $region3: #{tpu_custom_call.1} parent=1 // pred_check_branch
      %16 = sbr.rel (0) target = $region5
    $region4: #{tpu_custom_call.1} parent=1 // pred_region
      _
    $region5: #{tpu_custom_call.1} parent=1 // pred_fallthru
      _
    // Predicated region
    $region6: #{tpu_custom_call.1} parent=1 // pred_check
      _
    $region7: #{tpu_custom_call.1} parent=1 // pred_check_branch
      %18 = sbr.rel (0) target = $region9
    $region8: #{tpu_custom_call.1} parent=1 // pred_region
      %20 = vsyncadd [#allocation4], 0
      %s21 = sshll.u32 %s1, 4
      %s22 = int_to_ptr.hbm [resolvable:$true] %s21
      %s23 = sshll.u32 [#allocation3], 4
      %s24 = int_to_ptr.vmem [resolvable:$true] %s23
      %29 = dma.hbm_to_vmem [thread:$0]  %s22, 1024, %s24, [#allocation4], 128, 128, 8
    $region9: #{tpu_custom_call.1} parent=1 // pred_fallthru
      _
    // Predicated region
    $region10: #{tpu_custom_call.1} parent=1 // pred_check
      _
    $region11: #{tpu_custom_call.1} parent=1 // pred_check_branch
      %31 = sbr.rel (0) target = $region13
    $region12: #{tpu_custom_call.1} parent=1 // pred_region
      %33 = vsyncadd [#allocation7], 0
      %s34 = sshll.u32 %s2, 4
      %s35 = int_to_ptr.hbm [resolvable:$true] %s34
      %s36 = sshll.u32 [#allocation6], 4
      %s37 = int_to_ptr.vmem [resolvable:$true] %s36
      %42 = dma.hbm_to_vmem [thread:$0]  %s35, 128, %s37, [#allocation7], 64, 64, 4
    $region13: #{tpu_custom_call.1} parent=1 // pred_fallthru
      _
    // Predicated region
    $region14: #{tpu_custom_call.1} parent=1 // pred_check
      _
    $region15: #{tpu_custom_call.1} parent=1 // pred_check_branch
      %44 = sbr.rel (0) target = $region17
    $region16: #{tpu_custom_call.1} parent=1 // pred_region
      %46 = vsyncadd [#allocation7], 0
      %s47 = sshll.u32 %s3, 4
      %s48 = int_to_ptr.hbm [resolvable:$true] %s47
      %s49 = sshll.u32 [#allocation8], 4
      %s50 = int_to_ptr.vmem [resolvable:$true] %s49
      %55 = dma.hbm_to_vmem [thread:$0]  %s48, 128, %s50, [#allocation7], 64, 64, 4
    $region17: #{tpu_custom_call.1} parent=1 // pred_fallthru
      _
    // Predicated region
    $region18: #{tpu_custom_call.1} parent=1 // pred_check
      _
    $region19: #{tpu_custom_call.1} parent=1 // pred_check_branch
      %57 = sbr.rel (0) target = $region21
    $region20: #{tpu_custom_call.1} parent=1 // pred_region
      %59 = vsyncadd [#allocation10], 0
      %s60 = sshll.u32 %s4, 4
      %s61 = int_to_ptr.hbm [resolvable:$true] %s60
      %s62 = sshll.u32 [#allocation9], 4
      %s63 = int_to_ptr.vmem [resolvable:$true] %s62
      %68 = dma.hbm_to_vmem [thread:$0]  %s61, 128, %s63, [#allocation10], 64, 64, 4
    $region21: #{tpu_custom_call.1} parent=1 // pred_fallthru
      _
    // Predicated region
    $region22: #{tpu_custom_call.1} parent=1 // pred_check
      _
    $region23: #{tpu_custom_call.1} parent=1 // pred_check_branch
      %70 = sbr.rel (0) target = $region25
    $region24: #{tpu_custom_call.1} parent=1 // pred_region
      _
    $region25: #{tpu_custom_call.1} parent=1 // pred_fallthru
      _
    // Predicated region
    $region26: #{tpu_custom_call.1} parent=1 // pred_check
      _
    $region27: #{tpu_custom_call.1} parent=1 // pred_check_branch
      %72 = sbr.rel (0) target = $region29
    $region28: #{tpu_custom_call.1} parent=1 // pred_region
      %74 = dma.done [#allocation4], 1024
    $region29: #{tpu_custom_call.1} parent=1 // pred_fallthru
      _
    // Predicated region
    $region30: #{tpu_custom_call.1} parent=1 // pred_check
      _
    $region31: #{tpu_custom_call.1} parent=1 // pred_check_branch
      %76 = sbr.rel (0) target = $region33
    $region32: #{tpu_custom_call.1} parent=1 // pred_region
      %78 = dma.done [#allocation7], 128
    $region33: #{tpu_custom_call.1} parent=1 // pred_fallthru
      _
    // Predicated region
    $region34: #{tpu_custom_call.1} parent=1 // pred_check
      _
    $region35: #{tpu_custom_call.1} parent=1 // pred_check_branch
      %80 = sbr.rel (0) target = $region37
    $region36: #{tpu_custom_call.1} parent=1 // pred_region
      %82 = dma.done [#allocation7], 128
    $region37: #{tpu_custom_call.1} parent=1 // pred_fallthru
      _
    // Predicated region
    $region38: #{tpu_custom_call.1} parent=1 // pred_check
      _
    $region39: #{tpu_custom_call.1} parent=1 // pred_check_branch
      %84 = sbr.rel (0) target = $region41
    $region40: #{tpu_custom_call.1} parent=1 // pred_region
      %86 = dma.done [#allocation10], 128
    $region41: #{tpu_custom_call.1} parent=1 // pred_fallthru
      _
    %v88 = vld [vmem:[#allocation3] sm:$0xff]
    %v89 = vld [vmem:[#allocation3 + $0x8] sm:$0xff]
    %v90 = vld [vmem:[#allocation3 + $0x10] sm:$0xff]
    %v91 = vld [vmem:[#allocation3 + $0x18] sm:$0xff]
    %v92 = vld [vmem:[#allocation3 + $0x20] sm:$0xff]
    %v93 = vld [vmem:[#allocation3 + $0x28] sm:$0xff]
    %v94 = vld [vmem:[#allocation3 + $0x30] sm:$0xff]
    %v95 = vld [vmem:[#allocation3 + $0x38] sm:$0xff]
    %v96 = vunpack.c.l.bf16 %v88
    %v97 = vunpack.c.h.bf16 %v88
    %v98 = vunpack.c.l.bf16 %v89
    %v99 = vunpack.c.h.bf16 %v89
    %v100 = vunpack.c.l.bf16 %v92
    %v101 = vunpack.c.h.bf16 %v92
    %v102 = vunpack.c.l.bf16 %v93
    %v103 = vunpack.c.h.bf16 %v93
    %v104 = vsub.f32 %v96, %v100
    %v105 = vsub.f32 %v97, %v101
    %v106 = vsub.f32 %v98, %v102
    %v107 = vsub.f32 %v99, %v103
    %v108 = vpack.c.bf16 %v105, %v104
    %v109 = vpack.c.bf16 %v107, %v106
    %v110 = vand.u32 2147450879, %v108
    %v111 = vand.u32 2147450879, %v109
    %112 = vst [vmem:[#allocation2] sm:$0xff] %v110
    %113 = vst [vmem:[#allocation2 + $0x8] sm:$0xff] %v111
    %v114 = vunpack.c.l.bf16 %v90
    %v115 = vunpack.c.h.bf16 %v90
    %v116 = vunpack.c.l.bf16 %v91
    %v117 = vunpack.c.h.bf16 %v91
    %v118 = vunpack.c.l.bf16 %v94
    %v119 = vunpack.c.h.bf16 %v94
    %v120 = vunpack.c.l.bf16 %v95
    %v121 = vunpack.c.h.bf16 %v95
    %v122 = vsub.f32 %v114, %v118
    %v123 = vsub.f32 %v115, %v119
    %v124 = vsub.f32 %v116, %v120
    %v125 = vsub.f32 %v117, %v121
    %v126 = vpack.c.bf16 %v123, %v122
    %v127 = vpack.c.bf16 %v125, %v124
    %v128 = vand.u32 2147450879, %v126
    %v129 = vand.u32 2147450879, %v127
    %130 = vst [vmem:[#allocation2 + $0x10] sm:$0xff] %v128
    %131 = vst [vmem:[#allocation2 + $0x18] sm:$0xff] %v129
    %v132 = vld [vmem:[#allocation6] sm:$0xf]
    %v133 = vld [vmem:[#allocation6 + $0x4] sm:$0xf]
    %v134 = vld [vmem:[%s0] sm:$0xff]
    %v135 = vld [vmem:[%s0 + $0x8] sm:$0xff]
    %v136 = vld [vmem:[#allocation8] sm:$0xf]
    %v137 = vld [vmem:[#allocation8 + $0x4] sm:$0xf]
    %v138 = vld [vmem:[#allocation3] sm:$0xff]
    %v139 = vld [vmem:[#allocation3 + $0x8] sm:$0xff]
    %v140 = vld [vmem:[#allocation3 + $0x10] sm:$0xff]
    %v141 = vld [vmem:[#allocation3 + $0x18] sm:$0xff]
    %v142 = vld [vmem:[#allocation3 + $0x20] sm:$0xff]
    %v143 = vld [vmem:[#allocation3 + $0x28] sm:$0xff]
    %v144 = vld [vmem:[#allocation3 + $0x30] sm:$0xff]
    %v145 = vld [vmem:[#allocation3 + $0x38] sm:$0xff]
    %v148 = vunpack.c.l.b16 %v136
    %v149 = vunpack.c.l.b16 %v137
    %v150 = vpack.c.b16 %v149, %v148
    %v159 = vunpack.c.l.b16 %v138
    %v160 = vunpack.c.h.b16 %v138
    %v161 = vunpack.c.l.b16 %v139
    %v162 = vunpack.c.h.b16 %v139
    %v163 = vunpack.c.l.b16 %v140
    %v164 = vunpack.c.h.b16 %v140
    %v165 = vunpack.c.l.b16 %v141
    %v166 = vunpack.c.h.b16 %v141
    %v167 = vunpack.c.l.b16 %v142
    %v168 = vunpack.c.h.b16 %v142
    %v169 = vunpack.c.l.b16 %v143
    %v170 = vunpack.c.h.b16 %v143
    %v171 = vunpack.c.l.b16 %v144
    %v172 = vunpack.c.h.b16 %v144
    %v173 = vunpack.c.l.b16 %v145
    %v174 = vunpack.c.h.b16 %v145
    %v175 = vpack.c.b16 %v161, %v159
    %v176 = vpack.c.b16 %v162, %v160
    %v177 = vpack.c.b16 %v165, %v163
    %v178 = vpack.c.b16 %v166, %v164
    %v179 = vpack.c.b16 %v169, %v167
    %v180 = vpack.c.b16 %v170, %v168
    %v181 = vpack.c.b16 %v173, %v171
    %v182 = vpack.c.b16 %v174, %v172
    %vm191 = vcmask 523264
    %v193 = vsel %vm191, %v150, 0
    %195 = vmatpush.bf16.msra.mxu0 0
    %196 = vmatpush.bf16.msra.mxu0 0
    %197 = vmatpush.bf16.msra.mxu0 0
    %198 = vmatpush.bf16.msra.mxu0 0
    %199 = vmatpush.bf16.msra.mxu0 %v181
    %200 = vmatpush.bf16.msra.mxu0 %v179
    %201 = vmatpush.bf16.msra.mxu0 %v177
    %202 = vmatpush.bf16.msra.mxu0 %v175
    %203 = vmatmul.bf16.gmra.mxu0 %v193
    %v204 = vpop.f32.mrf.mxu0
    %v205 = vadd.f32 0.0, %v204
    %v206 = vpop.f32.mrf.mxu0
    %v207 = vadd.f32 0.0, %v206
    %208 = vdwg.mxu0
    %209 = vmatpush.bf16.msra.mxu0 0
    %210 = vmatpush.bf16.msra.mxu0 0
    %211 = vmatpush.bf16.msra.mxu0 0
    %212 = vmatpush.bf16.msra.mxu0 0
    %213 = vmatpush.bf16.msra.mxu0 %v182
    %214 = vmatpush.bf16.msra.mxu0 %v180
    %215 = vmatpush.bf16.msra.mxu0 %v178
    %216 = vmatpush.bf16.msra.mxu0 %v176
    %217 = vmatmul.bf16.gmra.mxu0 %v193
    %v218 = vpop.f32.mrf.mxu0
    %v219 = vadd.f32 0.0, %v218
    %v220 = vpop.f32.mrf.mxu0
    %v221 = vadd.f32 0.0, %v220
    %222 = vdwg.mxu0
    %v225 = vunpack.c.l.b16 %v132
    %v226 = vunpack.c.l.b16 %v133
    %v227 = vpack.c.b16 %v226, %v225
    %v230 = vunpack.c.l.b16 %v134
    %v231 = vunpack.c.h.b16 %v134
    %v232 = vunpack.c.l.b16 %v135
    %v233 = vunpack.c.h.b16 %v135
    %v234 = vpack.c.b16 %v232, %v230
    %v235 = vpack.c.b16 %v233, %v231
    %vm238 = vcmask 130048
    %v240 = vsel %vm238, %v227, 0
    %242 = vmatpush.bf16.msra.mxu0 0
    %243 = vmatpush.bf16.msra.mxu0 0
    %244 = vmatpush.bf16.msra.mxu0 0
    %245 = vmatpush.bf16.msra.mxu0 0
    %246 = vmatpush.bf16.msra.mxu0 0
    %247 = vmatpush.bf16.msra.mxu0 0
    %248 = vmatpush.bf16.msra.mxu0 0
    %249 = vmatpush.bf16.msra.mxu0 %v234
    %250 = vmatmul.bf16.gmra.mxu0 %v240
    %v251 = vpop.f32.mrf.mxu0
    %v252 = vadd.f32 %v205, %v251
    %v253 = vpop.f32.mrf.mxu0
    %v254 = vadd.f32 %v207, %v253
    %255 = vdwg.mxu0
    %256 = vmatpush.bf16.msra.mxu0 0
    %257 = vmatpush.bf16.msra.mxu0 0
    %258 = vmatpush.bf16.msra.mxu0 0
    %259 = vmatpush.bf16.msra.mxu0 0
    %260 = vmatpush.bf16.msra.mxu0 0
    %261 = vmatpush.bf16.msra.mxu0 0
    %262 = vmatpush.bf16.msra.mxu0 0
    %263 = vmatpush.bf16.msra.mxu0 %v235
    %264 = vmatmul.bf16.gmra.mxu0 %v240
    %v265 = vpop.f32.mrf.mxu0
    %v266 = vadd.f32 %v219, %v265
    %v267 = vpop.f32.mrf.mxu0
    %v268 = vadd.f32 %v221, %v267
    %269 = vdwg.mxu0
    %v270 = vld [vmem:[#allocation9] sm:$0xf]
    %v271 = vld [vmem:[#allocation9 + $0x4] sm:$0xf]
    %v272 = vld [vmem:[#allocation2] sm:$0xff]
    %v273 = vld [vmem:[#allocation2 + $0x8] sm:$0xff]
    %v274 = vld [vmem:[#allocation2 + $0x10] sm:$0xff]
    %v275 = vld [vmem:[#allocation2 + $0x18] sm:$0xff]
    %v278 = vunpack.c.l.b16 %v270
    %v279 = vunpack.c.l.b16 %v271
    %v280 = vpack.c.b16 %v279, %v278
    %v285 = vunpack.c.l.b16 %v272
    %v286 = vunpack.c.h.b16 %v272
    %v287 = vunpack.c.l.b16 %v273
    %v288 = vunpack.c.h.b16 %v273
    %v289 = vunpack.c.l.b16 %v274
    %v290 = vunpack.c.h.b16 %v274
    %v291 = vunpack.c.l.b16 %v275
    %v292 = vunpack.c.h.b16 %v275
    %v293 = vpack.c.b16 %v287, %v285
    %v294 = vpack.c.b16 %v288, %v286
    %v295 = vpack.c.b16 %v291, %v289
    %v296 = vpack.c.b16 %v292, %v290
    %vm301 = vcmask 261120
    %v303 = vsel %vm301, %v280, 0
    %305 = vmatpush.bf16.msra.mxu0 0
    %306 = vmatpush.bf16.msra.mxu0 0
    %307 = vmatpush.bf16.msra.mxu0 0
    %308 = vmatpush.bf16.msra.mxu0 0
    %309 = vmatpush.bf16.msra.mxu0 0
    %310 = vmatpush.bf16.msra.mxu0 0
    %311 = vmatpush.bf16.msra.mxu0 %v295
    %312 = vmatpush.bf16.msra.mxu0 %v293
    %313 = vmatmul.bf16.gmra.mxu0 %v303
    %v314 = vpop.f32.mrf.mxu0
    %v315 = vadd.f32 0.0, %v314
    %v316 = vpop.f32.mrf.mxu0
    %v317 = vadd.f32 0.0, %v316
    %318 = vdwg.mxu0
    %319 = vmatpush.bf16.msra.mxu0 0
    %320 = vmatpush.bf16.msra.mxu0 0
    %321 = vmatpush.bf16.msra.mxu0 0
    %322 = vmatpush.bf16.msra.mxu0 0
    %323 = vmatpush.bf16.msra.mxu0 0
    %324 = vmatpush.bf16.msra.mxu0 0
    %325 = vmatpush.bf16.msra.mxu0 %v296
    %326 = vmatpush.bf16.msra.mxu0 %v294
    %327 = vmatmul.bf16.gmra.mxu0 %v303
    %v328 = vpop.f32.mrf.mxu0
    %v329 = vadd.f32 0.0, %v328
    %v330 = vpop.f32.mrf.mxu0
    %v331 = vadd.f32 0.0, %v330
    %332 = vdwg.mxu0
    %v333 = vadd.f32 %v252, %v315
    %v334 = vadd.f32 %v266, %v329
    %v335 = vadd.f32 %v254, %v317
    %v336 = vadd.f32 %v268, %v331
    %v337 = vld [vmem:[%s5] sm:$0xff]
    %v338 = vld [vmem:[%s5 + $0x8] sm:$0xff]
    %340 = vset.pattern.permute.xlu0 0
    %341 = vperm.xlu0 %340, %v337
    %v342 = vpop.permute.xlu0 %341
    %345 = vset.pattern.permute.xlu0 0
    %346 = vperm.xlu0 %345, %v338
    %v347 = vpop.permute.xlu0 %346
    %v349 = vadd.f32 %v333, %v342
    %v350 = vadd.f32 %v334, %v342
    %v351 = vadd.f32 %v335, %v347
    %v352 = vadd.f32 %v336, %v347
    %353 = vst [vmem:[#allocation11] sm:$0xff] %v349
    %354 = vst [vmem:[#allocation11 + $0x8] sm:$0xff] %v350
    %355 = vst [vmem:[#allocation11 + $0x10] sm:$0xff] %v351
    %356 = vst [vmem:[#allocation11 + $0x18] sm:$0xff] %v352
    // Predicated region
    $region42: #{tpu_custom_call.1} parent=1 // pred_check
      _
    $region43: #{tpu_custom_call.1} parent=1 // pred_check_branch
      %358 = sbr.rel (0) target = $region45
    $region44: #{tpu_custom_call.1} parent=1 // pred_region
      %360 = vsyncadd [#allocation5], 0
      %s361 = sshll.u32 [#allocation11], 4
      %s362 = int_to_ptr.vmem [resolvable:$true] %s361
      %s363 = sshll.u32 %s6, 4
      %s364 = int_to_ptr.hbm [resolvable:$true] %s363
      %369 = dma.vmem_to_hbm [thread:$0]  %s362, 512, %s364, [#allocation5], 256, 256, 16
    $region45: #{tpu_custom_call.1} parent=1 // pred_fallthru
      _
    // Predicated region
    $region46: #{tpu_custom_call.1} parent=1 // pred_check
      _
    $region47: #{tpu_custom_call.1} parent=1 // pred_check_branch
      %371 = sbr.rel (0) target = $region49
    $region48: #{tpu_custom_call.1} parent=1 // pred_region
      %373 = dma.done [#allocation5], 512
    $region49: #{tpu_custom_call.1} parent=1 // pred_fallthru
      _
    %374 = vsyncpa [#allocation4], 1
    %375 = vsyncpa [#allocation7], 1
    %376 = vsyncpa [#allocation10], 1
    %377 = vsyncpa [#allocation5], 1

</llo_original>
